<compile_context>
chip_gen: v6e
topology: v6e:2x2x1
jax: 0.10.0
libtpu: 0.0.40
codegen_flags: <defaults>
</compile_context>

<pallas_src>
import jax
import jax.numpy as jnp
from jax.experimental import pallas as pl
from jax.experimental.pallas import tpu as pltpu

# ---- problem sizes (PyTorch defaults of SimpleWakeWordModel) -------------
B = 2                     # batch
C_IN = 13                 # n_mfcc
L = 101                   # num_frames
C_OUT = 32                # conv channels
KSIZE = 3                 # conv kernel, stride=1, padding=1 -> conv length = L
W_OUT = (L - 3) // 2 + 1  # MaxPool1d(kernel=3, stride=2) output length = 50
FC_IN = C_OUT * W_OUT     # 1600
HID = 64

PAD_L = L + 2             # padded length per batch = 103
MERGED = B * PAD_L - 2    # merged conv-output length = 204
POOL_POS = MERGED - 2     # running 3-window-max positions = 202
SUB = 8                   # sublane group size
G = C_OUT // SUB          # channel groups = 4
A_ROWS = B * SUB          # FC1 lhs rows = 16
A_COLS = G * W_OUT        # FC1 lhs cols = 200
Z_COLS = SUB * HID        # FC1 packed output cols = 512

_VMEM_SPEC = pl.BlockSpec(memory_space=pltpu.MemorySpace.VMEM)
_ANY_SPEC = pl.BlockSpec(memory_space=pl.ANY)


# ---------------------------------------------------------------------------
# Fused kernel: Conv1d + ReLU + MaxPool1d + Flatten + FC1 + ReLU + FC2 + Sigmoid
# ---------------------------------------------------------------------------
def wake_word_kernel(x3_ref, wc_ref, bc_ref, ssel_ref, diag_ref,
                     b1_ref, w2_ref, b2_ref, w1p_hbm,
                     o_ref, w1p_vmem, w1_sem):
    # x3_ref : (3*C_IN, MERGED)      padded, batch-merged, tap-stacked input
    # wc_ref : (C_OUT, 3*C_IN)       conv weight, taps folded into contraction
    # bc_ref : (C_OUT, 1)
    # ssel_ref: (POOL_POS, B*W_OUT)  0/1 matrix: stride-2 + per-batch column pick
    # diag_ref: (A_ROWS, Z_COLS)     0/1 mask keeping the s'==s blocks of FC1 out
    # b1_ref : (1, HID)   w2_ref: (1, HID)   b2_ref: (1, 1)
    # w1p_hbm: (A_COLS, Z_COLS) bf16 FC1 weight, left in HBM (pl.ANY)
    # o_ref  : (B, 1)
    # scratch: w1p_vmem (A_COLS, Z_COLS) bf16, w1_sem DMA semaphore

    # Kick off the big FC1-weight DMA so it overlaps conv/pool compute.
    w1_copy = pltpu.make_async_copy(w1p_hbm, w1p_vmem, w1_sem)
    w1_copy.start()

    # Conv1d(pad=1) over both batches at once: taps are pre-stacked on the host,
    # so the whole conv is a single lane-dense MXU matmul.
    r = jnp.dot(wc_ref[...], x3_ref[...], preferred_element_type=jnp.float32)
    r = jnp.maximum(r + bc_ref[...], 0.0)                       # (32, 204)

    # MaxPool1d(k=3, s=2): vectorized running 3-window max over lanes ...
    m = jnp.maximum(jnp.maximum(r[:, 0:POOL_POS], r[:, 1:POOL_POS + 1]),
                    r[:, 2:POOL_POS + 2])                       # (32, 202)

    # ... then stride-2 + per-batch column selection as one 0/1-matrix matmul.
    pooled = jnp.dot(m.astype(jnp.bfloat16), ssel_ref[...],
                     preferred_element_type=jnp.float32)        # (32, B*50)

    # Flatten with no per-element stores: rows = (b, s=c%8), lanes = (g=c//8, w).
    # The torch channel-major flatten order is absorbed into the W1 repacking.
    batch_rows = []
    for b in range(B):
        blk = pooled[:, b * W_OUT:(b + 1) * W_OUT]              # (32, 50)
        batch_rows.append(jnp.concatenate(
            [blk[g * SUB:(g + 1) * SUB, :] for g in range(G)], axis=1))  # (8, 200)
    a = jnp.concatenate(batch_rows, axis=0).astype(jnp.bfloat16)  # (16, 200)

    # FC1: bf16 MXU matmul against the packed weight, keep the s'==s diagonal
    # blocks, then reduce over the 8 sublanes per batch and the 8 lane chunks.
    w1_copy.wait()
    z = jnp.dot(a, w1p_vmem[...], preferred_element_type=jnp.float32)  # (16, 512)
    z = z * diag_ref[...]
    per_b = [jnp.sum(z[b * SUB:(b + 1) * SUB, :], axis=0, keepdims=True)
             for b in range(B)]
    zrow = jnp.concatenate(per_b, axis=0)                        # (B, 512)
    z1 = zrow[:, 0:HID]
    for s in range(1, SUB):
        z1 = z1 + zrow[:, s * HID:(s + 1) * HID]                 # (B, 64)
    a1 = jnp.maximum(z1 + b1_ref[...], 0.0)                      # FC1 + ReLU

    # FC2 (64 -> 1) as VPU multiply + lane reduction; stable sigmoid.
    z2 = jnp.sum(a1 * w2_ref[...], axis=1, keepdims=True) + b2_ref[...]  # (B, 1)
    e = jnp.exp(-jnp.abs(z2))
    o_ref[...] = jnp.where(z2 >= 0.0, 1.0 / (1.0 + e), e / (1.0 + e))


# ---------------------------------------------------------------------------
# One-time parameter repacking (hoisted out of the forward path).
# ---------------------------------------------------------------------------
def pack_params(params):
    Wc, bc, W1, b1, W2, b2 = params
    # conv weight with taps folded into the contraction: [o, k*13+ci] = Wc[o,ci,k]
    wc_k = Wc.transpose(0, 2, 1).reshape(C_OUT, KSIZE * C_IN).astype(jnp.float32)
    bc_k = bc.reshape(C_OUT, 1)
    # FC1 weight packed for the (b*8+s, g*50+w) x (g*50+w, s*64+n) matmul:
    #   w1p[g*50+w, s*64+n] = W1[n, (8g+s)*50+w]   (bf16: halves the dominant DMA)
    w1p = (W1.reshape(HID, G, SUB, W_OUT)
             .transpose(1, 3, 2, 0)
             .reshape(A_COLS, Z_COLS)
             .astype(jnp.bfloat16))
    b1_k = b1.reshape(1, HID)
    w2_k = W2.reshape(1, HID)
    b2_k = b2.reshape(1, 1)
    # 0/1 selection matrix: pooled[:, b*50+w] = m[:, b*PAD_L + 2w]
    j = jnp.arange(POOL_POS)[:, None]
    q = jnp.arange(B * W_OUT)[None, :]
    ssel = (j == (q // W_OUT) * PAD_L + 2 * (q % W_OUT)).astype(jnp.bfloat16)
    # diag-block mask: keep FC1 output column chunk s' == row's s
    rr = jnp.arange(A_ROWS)[:, None] % SUB
    cc = jnp.arange(Z_COLS)[None, :] // HID
    diag = (rr == cc).astype(jnp.float32)
    return wc_k, bc_k, ssel, diag, b1_k, w2_k, b2_k, w1p


# ---------------------------------------------------------------------------
# Forward: host glue builds the padded, batch-merged, tap-stacked conv input
# (pad=1 fused into the same tiny transpose/gather XLA already does).
# ---------------------------------------------------------------------------
@jax.jit
def wake_word_forward(x, packed):
    wc_k, bc_k, ssel, diag, b1_k, w2_k, b2_k, w1p = packed
    xpad = jnp.zeros((C_IN, B * PAD_L), jnp.float32)
    for b in range(B):
        xpad = xpad.at[:, b * PAD_L + 1:b * PAD_L + 1 + L].set(x[b])
    x3 = jnp.concatenate([xpad[:, k:k + MERGED] for k in range(KSIZE)], axis=0)
    return pl.pallas_call(
        wake_word_kernel,
        out_shape=jax.ShapeDtypeStruct((B, 1), jnp.float32),
        in_specs=[_VMEM_SPEC] * 8 + [_ANY_SPEC],     # W1 stays in HBM, DMA'd manually
        out_specs=_VMEM_SPEC,
        scratch_shapes=[
            pltpu.VMEM((A_COLS, Z_COLS), jnp.bfloat16),   # FC1 weight landing buffer
            pltpu.SemaphoreType.DMA(()),                  # its DMA semaphore
        ],
    )(x3, wc_k, bc_k, ssel, diag, b1_k, w2_k, b2_k, w1p)


# ---------------------------------------------------------------------------
# Pure-JAX reference (mirrors the PyTorch forward in NCW layout, f32)
# ---------------------------------------------------------------------------
def reference_forward(x, params):
    Wc, bc, W1, b1, W2, b2 = params
    xp = jnp.pad(x, ((0, 0), (0, 0), (1, 1)))
    conv = sum(jnp.einsum("oc,bct->bot", Wc[:, :, k], xp[:, :, k:k + L])
               for k in range(KSIZE)) + bc[None, :, None]
    r = jnp.maximum(conv, 0.0)
    p = jnp.maximum(jnp.maximum(r[:, :, 0:2 * W_OUT - 1:2],
                                r[:, :, 1:2 * W_OUT:2]),
                    r[:, :, 2:2 * W_OUT + 1:2])          # (B, 32, W_OUT)
    h = p.reshape(B, FC_IN)                              # channel-major flatten (torch .view)
    z1 = jnp.maximum(h @ W1.T + b1, 0.0)
    z2 = z1 @ W2.T + b2
    return jax.nn.sigmoid(z2)


if __name__ == "__main__":
    key = jax.random.PRNGKey(0)
    kx, kwc, kbc, kw1, kb1, kw2, kb2 = jax.random.split(key, 7)

    # deterministic synthetic parameters (PyTorch module shapes)
    Wc = jax.random.normal(kwc, (C_OUT, C_IN, KSIZE), jnp.float32) * 0.1
    bc = jax.random.normal(kbc, (C_OUT,), jnp.float32) * 0.1
    W1 = jax.random.normal(kw1, (HID, FC_IN), jnp.float32) * 0.05
    b1 = jax.random.normal(kb1, (HID,), jnp.float32) * 0.05
    W2 = jax.random.normal(kw2, (1, HID), jnp.float32) * 0.1
    b2 = jax.random.normal(kb2, (1,), jnp.float32) * 0.1
    params = (Wc, bc, W1, b1, W2, b2)

    x = jax.random.normal(kx, (B, C_IN, L), jnp.float32)   # (batch, n_mfcc, num_frames)

    packed = jax.block_until_ready(pack_params(params))    # one-time weight repack
    out = jax.block_until_ready(wake_word_forward(x, packed))

    ref = reference_forward(x, params)
    assert out.shape == (B, 1)
    # tolerance loosened vs f32-only: FC1 weights/activations run through bf16 MXU
    assert jnp.allclose(out, ref, atol=2e-2, rtol=2e-2), (out, ref)

    print("KERNEL_OK")
</pallas_src>

<mosaic_0001>
module attributes {stable_mosaic.version = 11 : i64} {
  func.func @wake_word_kernel(%arg0: memref<39x204xf32, #tpu.memory_space<vmem>>, %arg1: memref<32x39xf32, #tpu.memory_space<vmem>>, %arg2: memref<32x1xf32, #tpu.memory_space<vmem>>, %arg3: memref<202x100xbf16, #tpu.memory_space<vmem>>, %arg4: memref<16x512xf32, #tpu.memory_space<vmem>>, %arg5: memref<1x64xf32, #tpu.memory_space<vmem>>, %arg6: memref<1x64xf32, #tpu.memory_space<vmem>>, %arg7: memref<1x1xf32, #tpu.memory_space<vmem>>, %arg8: memref<200x512xbf16, #tpu.memory_space<any>>, %arg9: memref<2x1xf32, #tpu.memory_space<vmem>>, %arg10: memref<200x512xbf16, #tpu.memory_space<vmem>>, %arg11: memref<!tpu.dma_semaphore, #tpu.memory_space<semaphore_mem>>) attributes {dimension_semantics = [], scalar_prefetch = 0 : i64, scratch_operands = 2 : i64, tpu.core_type = #tpu.core_type<tc>} {
    tpu.enqueue_dma source(%arg8 : memref<200x512xbf16, #tpu.memory_space<any>>) target(%arg10 : memref<200x512xbf16, #tpu.memory_space<vmem>>) target_semaphore(%arg11 : memref<!tpu.dma_semaphore, #tpu.memory_space<semaphore_mem>>)
    %c0 = arith.constant 0 : index
    %c0_0 = arith.constant 0 : index
    %0 = vector.load %arg1[%c0, %c0_0] : memref<32x39xf32, #tpu.memory_space<vmem>>, vector<32x39xf32>
    %c0_1 = arith.constant 0 : index
    %c0_2 = arith.constant 0 : index
    %1 = vector.load %arg0[%c0_1, %c0_2] : memref<39x204xf32, #tpu.memory_space<vmem>>, vector<39x204xf32>
    %cst = arith.constant dense<0.000000e+00> : vector<32x204xf32>
    %2 = tpu.matmul %0, %1, %cst {dimension_numbers = #tpu.dot_dimension_numbers<[1], [0], [0], [1], [0, 0, 1, 1], [], []>} : vector<32x39xf32>, vector<39x204xf32>, vector<32x204xf32> -> vector<32x204xf32>
    %c0_3 = arith.constant 0 : index
    %c0_4 = arith.constant 0 : index
    %3 = vector.load %arg2[%c0_3, %c0_4] : memref<32x1xf32, #tpu.memory_space<vmem>>, vector<32x1xf32>
    %4 = vector.broadcast %3 : vector<32x1xf32> to vector<32x204xf32>
    %5 = arith.addf %2, %4 : vector<32x204xf32>
    %cst_5 = arith.constant 0.000000e+00 : f32
    %6 = vector.broadcast %cst_5 : f32 to vector<32x204xf32>
    %7 = arith.maximumf %5, %6 : vector<32x204xf32>
    %8 = vector.extract_strided_slice %7 {offsets = [0, 0], sizes = [32, 202], strides = [1, 1]} : vector<32x204xf32> to vector<32x202xf32>
    %9 = vector.extract_strided_slice %7 {offsets = [0, 1], sizes = [32, 202], strides = [1, 1]} : vector<32x204xf32> to vector<32x202xf32>
    %10 = arith.maximumf %8, %9 : vector<32x202xf32>
    %11 = vector.extract_strided_slice %7 {offsets = [0, 2], sizes = [32, 202], strides = [1, 1]} : vector<32x204xf32> to vector<32x202xf32>
    %12 = arith.maximumf %10, %11 : vector<32x202xf32>
    %13 = arith.truncf %12 : vector<32x202xf32> to vector<32x202xbf16>
    %c0_6 = arith.constant 0 : index
    %c0_7 = arith.constant 0 : index
    %14 = vector.load %arg3[%c0_6, %c0_7] : memref<202x100xbf16, #tpu.memory_space<vmem>>, vector<202x100xbf16>
    %cst_8 = arith.constant dense<0.000000e+00> : vector<32x100xf32>
    %15 = tpu.matmul %13, %14, %cst_8 {dimension_numbers = #tpu.dot_dimension_numbers<[1], [0], [0], [1], [0, 0, 1, 1], [], []>} : vector<32x202xbf16>, vector<202x100xbf16>, vector<32x100xf32> -> vector<32x100xf32>
    %16 = vector.extract_strided_slice %15 {offsets = [0, 0], sizes = [32, 50], strides = [1, 1]} : vector<32x100xf32> to vector<32x50xf32>
    %17 = vector.extract_strided_slice %16 {offsets = [0, 0], sizes = [8, 50], strides = [1, 1]} : vector<32x50xf32> to vector<8x50xf32>
    %18 = vector.extract_strided_slice %16 {offsets = [8, 0], sizes = [8, 50], strides = [1, 1]} : vector<32x50xf32> to vector<8x50xf32>
    %19 = vector.extract_strided_slice %16 {offsets = [16, 0], sizes = [8, 50], strides = [1, 1]} : vector<32x50xf32> to vector<8x50xf32>
    %20 = vector.extract_strided_slice %16 {offsets = [24, 0], sizes = [8, 50], strides = [1, 1]} : vector<32x50xf32> to vector<8x50xf32>
    %21 = tpu.concatenate %17, %18, %19, %20 in 1 : vector<8x50xf32>, vector<8x50xf32>, vector<8x50xf32>, vector<8x50xf32> -> vector<8x200xf32>
    %22 = vector.extract_strided_slice %15 {offsets = [0, 50], sizes = [32, 50], strides = [1, 1]} : vector<32x100xf32> to vector<32x50xf32>
    %23 = vector.extract_strided_slice %22 {offsets = [0, 0], sizes = [8, 50], strides = [1, 1]} : vector<32x50xf32> to vector<8x50xf32>
    %24 = vector.extract_strided_slice %22 {offsets = [8, 0], sizes = [8, 50], strides = [1, 1]} : vector<32x50xf32> to vector<8x50xf32>
    %25 = vector.extract_strided_slice %22 {offsets = [16, 0], sizes = [8, 50], strides = [1, 1]} : vector<32x50xf32> to vector<8x50xf32>
    %26 = vector.extract_strided_slice %22 {offsets = [24, 0], sizes = [8, 50], strides = [1, 1]} : vector<32x50xf32> to vector<8x50xf32>
    %27 = tpu.concatenate %23, %24, %25, %26 in 1 : vector<8x50xf32>, vector<8x50xf32>, vector<8x50xf32>, vector<8x50xf32> -> vector<8x200xf32>
    %28 = tpu.concatenate %21, %27 in 0 : vector<8x200xf32>, vector<8x200xf32> -> vector<16x200xf32>
    %29 = arith.truncf %28 : vector<16x200xf32> to vector<16x200xbf16>
    tpu.wait_dma2 semaphore(%arg11 : memref<!tpu.dma_semaphore, #tpu.memory_space<semaphore_mem>>) src(%arg8 : memref<200x512xbf16, #tpu.memory_space<any>>) dst(%arg10 : memref<200x512xbf16, #tpu.memory_space<vmem>>)
    %c0_9 = arith.constant 0 : index
    %c0_10 = arith.constant 0 : index
    %30 = vector.load %arg10[%c0_9, %c0_10] : memref<200x512xbf16, #tpu.memory_space<vmem>>, vector<200x512xbf16>
    %cst_11 = arith.constant dense<0.000000e+00> : vector<16x512xf32>
    %31 = tpu.matmul %29, %30, %cst_11 {dimension_numbers = #tpu.dot_dimension_numbers<[1], [0], [0], [1], [0, 0, 1, 1], [], []>} : vector<16x200xbf16>, vector<200x512xbf16>, vector<16x512xf32> -> vector<16x512xf32>
    %c0_12 = arith.constant 0 : index
    %c0_13 = arith.constant 0 : index
    %32 = vector.load %arg4[%c0_12, %c0_13] : memref<16x512xf32, #tpu.memory_space<vmem>>, vector<16x512xf32>
    %33 = arith.mulf %31, %32 : vector<16x512xf32>
    %34 = vector.extract_strided_slice %33 {offsets = [0, 0], sizes = [8, 512], strides = [1, 1]} : vector<16x512xf32> to vector<8x512xf32>
    %cst_14 = arith.constant dense<0.000000e+00> : vector<512xf32>
    %35 = vector.multi_reduction <add>, %34, %cst_14 [0] : vector<8x512xf32> to vector<512xf32>
    %36 = vector.shape_cast %35 : vector<512xf32> to vector<1x512xf32>
    %37 = vector.extract_strided_slice %33 {offsets = [8, 0], sizes = [8, 512], strides = [1, 1]} : vector<16x512xf32> to vector<8x512xf32>
    %cst_15 = arith.constant dense<0.000000e+00> : vector<512xf32>
    %38 = vector.multi_reduction <add>, %37, %cst_15 [0] : vector<8x512xf32> to vector<512xf32>
    %39 = vector.shape_cast %38 : vector<512xf32> to vector<1x512xf32>
    %40 = tpu.concatenate %36, %39 in 0 : vector<1x512xf32>, vector<1x512xf32> -> vector<2x512xf32>
    %41 = vector.extract_strided_slice %40 {offsets = [0, 0], sizes = [2, 64], strides = [1, 1]} : vector<2x512xf32> to vector<2x64xf32>
    %42 = vector.extract_strided_slice %40 {offsets = [0, 64], sizes = [2, 64], strides = [1, 1]} : vector<2x512xf32> to vector<2x64xf32>
    %43 = arith.addf %41, %42 : vector<2x64xf32>
    %44 = vector.extract_strided_slice %40 {offsets = [0, 128], sizes = [2, 64], strides = [1, 1]} : vector<2x512xf32> to vector<2x64xf32>
    %45 = arith.addf %43, %44 : vector<2x64xf32>
    %46 = vector.extract_strided_slice %40 {offsets = [0, 192], sizes = [2, 64], strides = [1, 1]} : vector<2x512xf32> to vector<2x64xf32>
    %47 = arith.addf %45, %46 : vector<2x64xf32>
    %48 = vector.extract_strided_slice %40 {offsets = [0, 256], sizes = [2, 64], strides = [1, 1]} : vector<2x512xf32> to vector<2x64xf32>
    %49 = arith.addf %47, %48 : vector<2x64xf32>
    %50 = vector.extract_strided_slice %40 {offsets = [0, 320], sizes = [2, 64], strides = [1, 1]} : vector<2x512xf32> to vector<2x64xf32>
    %51 = arith.addf %49, %50 : vector<2x64xf32>
    %52 = vector.extract_strided_slice %40 {offsets = [0, 384], sizes = [2, 64], strides = [1, 1]} : vector<2x512xf32> to vector<2x64xf32>
    %53 = arith.addf %51, %52 : vector<2x64xf32>
    %54 = vector.extract_strided_slice %40 {offsets = [0, 448], sizes = [2, 64], strides = [1, 1]} : vector<2x512xf32> to vector<2x64xf32>
    %55 = arith.addf %53, %54 : vector<2x64xf32>
    %c0_16 = arith.constant 0 : index
    %c0_17 = arith.constant 0 : index
    %56 = vector.load %arg5[%c0_16, %c0_17] : memref<1x64xf32, #tpu.memory_space<vmem>>, vector<1x64xf32>
    %57 = vector.broadcast %56 : vector<1x64xf32> to vector<2x64xf32>
    %58 = arith.addf %55, %57 : vector<2x64xf32>
    %cst_18 = arith.constant 0.000000e+00 : f32
    %59 = vector.broadcast %cst_18 : f32 to vector<2x64xf32>
    %60 = arith.maximumf %58, %59 : vector<2x64xf32>
    %c0_19 = arith.constant 0 : index
    %c0_20 = arith.constant 0 : index
    %61 = vector.load %arg6[%c0_19, %c0_20] : memref<1x64xf32, #tpu.memory_space<vmem>>, vector<1x64xf32>
    %62 = vector.broadcast %61 : vector<1x64xf32> to vector<2x64xf32>
    %63 = arith.mulf %60, %62 : vector<2x64xf32>
    %cst_21 = arith.constant dense<0.000000e+00> : vector<2xf32>
    %64 = vector.multi_reduction <add>, %63, %cst_21 [1] : vector<2x64xf32> to vector<2xf32>
    %65 = vector.shape_cast %64 : vector<2xf32> to vector<2x1xf32>
    %c0_22 = arith.constant 0 : index
    %c0_23 = arith.constant 0 : index
    %66 = vector.load %arg7[%c0_22, %c0_23] : memref<1x1xf32, #tpu.memory_space<vmem>>, vector<1x1xf32>
    %67 = vector.broadcast %66 : vector<1x1xf32> to vector<2x1xf32>
    %68 = arith.addf %65, %67 : vector<2x1xf32>
    %69 = math.absf %68 : vector<2x1xf32>
    %cst_24 = arith.constant 0.000000e+00 : f32
    %70 = vector.broadcast %cst_24 : f32 to vector<2x1xf32>
    %71 = arith.subf %70, %69 : vector<2x1xf32>
    %72 = math.exp %71 : vector<2x1xf32>
    %cst_25 = arith.constant 0.000000e+00 : f32
    %73 = vector.broadcast %cst_25 : f32 to vector<2x1xf32>
    %74 = arith.cmpf oge, %68, %73 : vector<2x1xf32>
    %cst_26 = arith.constant 1.000000e+00 : f32
    %75 = vector.broadcast %cst_26 : f32 to vector<2x1xf32>
    %76 = arith.addf %75, %72 : vector<2x1xf32>
    %cst_27 = arith.constant 1.000000e+00 : f32
    %77 = vector.broadcast %cst_27 : f32 to vector<2x1xf32>
    %78 = arith.divf %77, %76 : vector<2x1xf32>
    %cst_28 = arith.constant 1.000000e+00 : f32
    %79 = vector.broadcast %cst_28 : f32 to vector<2x1xf32>
    %80 = arith.addf %79, %72 : vector<2x1xf32>
    %81 = arith.divf %72, %80 : vector<2x1xf32>
    %82 = arith.select %74, %78, %81 : vector<2x1xi1>, vector<2x1xf32>
    %c0_29 = arith.constant 0 : index
    %c0_30 = arith.constant 0 : index
    %83 = vector.load %arg9[%c0_29, %c0_30] : memref<2x1xf32, #tpu.memory_space<vmem>>, vector<2x1xf32>
    tpu.vector_store %arg9[%c0_29, %c0_30], %82 {strides = array<i32>} : memref<2x1xf32, #tpu.memory_space<vmem>>, vector<2x1xf32>,
    return
  }
}

</mosaic_0001>

<llo_original>
// kernel: wake_word_forward.1
$region0: #{wake_word_forward.1}
  #allocation0 [shape = 'u32[]', space=smem, size = 0x4, offset = 0x4, fixed_abs, tag = 'smem constant byte address 0x4 - core index']
  #allocation1 [shape = 'u32[144,128]{1,0:T(1,128)}', space=vmem, size = 0x12000, scoped, tag = 'internal scratch']
  #allocation2 [shape = 'bf16[200,512]{1,0:T(8,128)(2,1)}', space=vmem, size = 0x32000, scoped, tag = 'scratch operand']
  #allocation3 [shape = 's32[1]{0}', space=sflag, size = 0x4, scoped, tag = 'scratch operand']
  #allocation4 [shape = 'f32[1,1]{1,0:T(1,128)S(1)}', space=vmem, size = 0x200, scoped, tag = 'scoped memory for wake_word_forward.1']
  #allocation5 [shape = 's32[]', space=sflag, size = 0x4, offset = 0, fixed_abs, tag = 'sflag constant byte address 0x0 - dummy sync flag']
  %s0 = inlined_call_operand.vmem [shape: f32[39,204], index: 0, kind: input, shape index: {}]
  %s1 = inlined_call_operand.vmem [shape: f32[32,39], index: 1, kind: input, shape index: {}]
  %s2 = inlined_call_operand.vmem [shape: f32[32,1], index: 2, kind: input, shape index: {}]
  %s3 = inlined_call_operand.vmem [shape: bf16[202,100], index: 3, kind: input, shape index: {}]
  %s4 = inlined_call_operand.vmem [shape: f32[16,512], index: 4, kind: input, shape index: {}]
  %s5 = inlined_call_operand.vmem [shape: f32[1,64], index: 5, kind: input, shape index: {}]
  %s6 = inlined_call_operand.vmem [shape: f32[1,64], index: 6, kind: input, shape index: {}]
  %s7 = inlined_call_operand.<no memory space> [shape: f32[1,1], index: 7, kind: input, shape index: {}]
  %s8 = inlined_call_operand.vmem [shape: bf16[200,512], index: 8, kind: input, shape index: {}]
  %s9 = inlined_call_operand.vmem [shape: f32[2,1], index: 9, kind: output, shape index: {}]
  %s10 = sld [smem:[#allocation0]]
  $region76: #{wake_word_forward.1} parent=0
    _
  %s12 = ssub.s32 1, %s10
  %s13 = scalar_select 0, %s12, %s10
  %v14 = vstv %s7
  %15 = vst [vmem:[#allocation4] sm:$0x1] %v14
  // Predicated region
  $region2: #{wake_word_forward.1} parent=0 // pred_check
    _
  $region3: #{wake_word_forward.1} parent=0 // pred_check_branch
    %17 = sbr.rel (0) target = $region5
  $region4: #{wake_word_forward.1} parent=0 // pred_region
    _
  $region5: #{wake_word_forward.1} parent=0 // pred_fallthru
    _
  // Predicated region
  $region6: #{wake_word_forward.1} parent=0 // pred_check
    _
  $region7: #{wake_word_forward.1} parent=0 // pred_check_branch
    %19 = sbr.rel (0) target = $region9
  $region8: #{wake_word_forward.1} parent=0 // pred_region
    _
  $region9: #{wake_word_forward.1} parent=0 // pred_fallthru
    _
  // Predicated region
  $region10: #{wake_word_forward.1} parent=0 // pred_check
    _
  $region11: #{wake_word_forward.1} parent=0 // pred_check_branch
    %21 = sbr.rel (0) target = $region13
  $region12: #{wake_word_forward.1} parent=0 // pred_region
    _
  $region13: #{wake_word_forward.1} parent=0 // pred_fallthru
    _
  // Predicated region
  $region14: #{wake_word_forward.1} parent=0 // pred_check
    _
  $region15: #{wake_word_forward.1} parent=0 // pred_check_branch
    %23 = sbr.rel (0) target = $region17
  $region16: #{wake_word_forward.1} parent=0 // pred_region
    _
  $region17: #{wake_word_forward.1} parent=0 // pred_fallthru
    _
  // Predicated region
  $region18: #{wake_word_forward.1} parent=0 // pred_check
    _
  $region19: #{wake_word_forward.1} parent=0 // pred_check_branch
    %25 = sbr.rel (0) target = $region21
  $region20: #{wake_word_forward.1} parent=0 // pred_region
    _
  $region21: #{wake_word_forward.1} parent=0 // pred_fallthru
    _
  // Predicated region
  $region22: #{wake_word_forward.1} parent=0 // pred_check
    _
  $region23: #{wake_word_forward.1} parent=0 // pred_check_branch
    %27 = sbr.rel (0) target = $region25
  $region24: #{wake_word_forward.1} parent=0 // pred_region
    _
  $region25: #{wake_word_forward.1} parent=0 // pred_fallthru
    _
  // Predicated region
  $region26: #{wake_word_forward.1} parent=0 // pred_check
    _
  $region27: #{wake_word_forward.1} parent=0 // pred_check_branch
    %29 = sbr.rel (0) target = $region29
  $region28: #{wake_word_forward.1} parent=0 // pred_region
    _
  $region29: #{wake_word_forward.1} parent=0 // pred_fallthru
    _
  // Predicated region
  $region30: #{wake_word_forward.1} parent=0 // pred_check
    _
  $region31: #{wake_word_forward.1} parent=0 // pred_check_branch
    %31 = sbr.rel (0) target = $region33
  $region32: #{wake_word_forward.1} parent=0 // pred_region
    _
  $region33: #{wake_word_forward.1} parent=0 // pred_fallthru
    _
  %p34 = scmp.lt.u32.totalorder 400, 8
  %p35 = pneg %p34
  // Predicated region
  $region34: #{wake_word_forward.1} parent=0 // pred_check
    _
  $region35: #{wake_word_forward.1} parent=0 // pred_check_branch
    %37 = sbr.rel (%p34) target = $region37
  $region36: #{wake_word_forward.1} parent=0 // pred_region
    %s53 = sand.u32 400, 7
    %p54 = scmp.eq.s32.totalorder %s53, 0
    // Predicated region
    $region49: #{wake_word_forward.1} parent=36 // pred_check
      %p55 = pneg %p54
    $region50: #{wake_word_forward.1} parent=36 // pred_check_branch
      %57 = sbr.rel (%p55) target = $region52
    $region51: #{wake_word_forward.1} parent=36 // pred_region
      loop: start=0, step=1, limit=1
      $region53: #{wake_word_forward.1} parent=51 // loop_pre_header
        _
      $region54: #{wake_word_forward.1} parent=51 // loop_header
        %s59 = sphi 0, %s63
        %p60 = scmp.ge.s32.totalorder %s59, 1
        %s64 = sphi %s8, %s8
        %s65 = sphi [#allocation2], [#allocation2]
      $region55: #{wake_word_forward.1} parent=51 // loop_header_branch
        %62 = sbr.rel (%p60) target = $region59
      $region56: #{wake_word_forward.1} parent=51 // loop_body
        %v66 = vld [vmem:[%s64] sm:$0xff]
        %67 = vst [vmem:[%s65] sm:$0xff] %v66
        %v68 = vld [vmem:[%s64 + $0x8] sm:$0xff]
        %69 = vst [vmem:[%s65 + $0x8] sm:$0xff] %v68
        %v70 = vld [vmem:[%s64 + $0x10] sm:$0xff]
        %71 = vst [vmem:[%s65 + $0x10] sm:$0xff] %v70
        %v72 = vld [vmem:[%s64 + $0x18] sm:$0xff]
        %73 = vst [vmem:[%s65 + $0x18] sm:$0xff] %v72
        %v74 = vld [vmem:[%s64 + $0x20] sm:$0xff]
        %75 = vst [vmem:[%s65 + $0x20] sm:$0xff] %v74
        %v76 = vld [vmem:[%s64 + $0x28] sm:$0xff]
        %77 = vst [vmem:[%s65 + $0x28] sm:$0xff] %v76
        %v78 = vld [vmem:[%s64 + $0x30] sm:$0xff]
        %79 = vst [vmem:[%s65 + $0x30] sm:$0xff] %v78
        %v80 = vld [vmem:[%s64 + $0x38] sm:$0xff]
        %81 = vst [vmem:[%s65 + $0x38] sm:$0xff] %v80
        %v82 = vld [vmem:[%s64 + $0x40] sm:$0xff]
        %83 = vst [vmem:[%s65 + $0x40] sm:$0xff] %v82
        %v84 = vld [vmem:[%s64 + $0x48] sm:$0xff]
        %85 = vst [vmem:[%s65 + $0x48] sm:$0xff] %v84
        %v86 = vld [vmem:[%s64 + $0x50] sm:$0xff]
        %87 = vst [vmem:[%s65 + $0x50] sm:$0xff] %v86
        %v88 = vld [vmem:[%s64 + $0x58] sm:$0xff]
        %89 = vst [vmem:[%s65 + $0x58] sm:$0xff] %v88
        %v90 = vld [vmem:[%s64 + $0x60] sm:$0xff]
        %91 = vst [vmem:[%s65 + $0x60] sm:$0xff] %v90
        %v92 = vld [vmem:[%s64 + $0x68] sm:$0xff]
        %93 = vst [vmem:[%s65 + $0x68] sm:$0xff] %v92
        %v94 = vld [vmem:[%s64 + $0x70] sm:$0xff]
        %95 = vst [vmem:[%s65 + $0x70] sm:$0xff] %v94
        %v96 = vld [vmem:[%s64 + $0x78] sm:$0xff]
        %97 = vst [vmem:[%s65 + $0x78] sm:$0xff] %v96
        %v98 = vld [vmem:[%s64 + $0x80] sm:$0xff]
        %99 = vst [vmem:[%s65 + $0x80] sm:$0xff] %v98
        %v100 = vld [vmem:[%s64 + $0x88] sm:$0xff]
        %101 = vst [vmem:[%s65 + $0x88] sm:$0xff] %v100
        %v102 = vld [vmem:[%s64 + $0x90] sm:$0xff]
        %103 = vst [vmem:[%s65 + $0x90] sm:$0xff] %v102
        %v104 = vld [vmem:[%s64 + $0x98] sm:$0xff]
        %105 = vst [vmem:[%s65 + $0x98] sm:$0xff] %v104
        %v106 = vld [vmem:[%s64 + $0xa0] sm:$0xff]
        %107 = vst [vmem:[%s65 + $0xa0] sm:$0xff] %v106
        %v108 = vld [vmem:[%s64 + $0xa8] sm:$0xff]
        %109 = vst [vmem:[%s65 + $0xa8] sm:$0xff] %v108
        %v110 = vld [vmem:[%s64 + $0xb0] sm:$0xff]
        %111 = vst [vmem:[%s65 + $0xb0] sm:$0xff] %v110
        %v112 = vld [vmem:[%s64 + $0xb8] sm:$0xff]
        %113 = vst [vmem:[%s65 + $0xb8] sm:$0xff] %v112
        %v114 = vld [vmem:[%s64 + $0xc0] sm:$0xff]
        %115 = vst [vmem:[%s65 + $0xc0] sm:$0xff] %v114
        %v116 = vld [vmem:[%s64 + $0xc8] sm:$0xff]
        %117 = vst [vmem:[%s65 + $0xc8] sm:$0xff] %v116
        %v118 = vld [vmem:[%s64 + $0xd0] sm:$0xff]
        %119 = vst [vmem:[%s65 + $0xd0] sm:$0xff] %v118
        %v120 = vld [vmem:[%s64 + $0xd8] sm:$0xff]
        %121 = vst [vmem:[%s65 + $0xd8] sm:$0xff] %v120
        %v122 = vld [vmem:[%s64 + $0xe0] sm:$0xff]
        %123 = vst [vmem:[%s65 + $0xe0] sm:$0xff] %v122
        %v124 = vld [vmem:[%s64 + $0xe8] sm:$0xff]
        %125 = vst [vmem:[%s65 + $0xe8] sm:$0xff] %v124
        %v126 = vld [vmem:[%s64 + $0xf0] sm:$0xff]
        %127 = vst [vmem:[%s65 + $0xf0] sm:$0xff] %v126
        %v128 = vld [vmem:[%s64 + $0xf8] sm:$0xff]
        %129 = vst [vmem:[%s65 + $0xf8] sm:$0xff] %v128
        %v130 = vld [vmem:[%s64 + $0x100] sm:$0xff]
        %131 = vst [vmem:[%s65 + $0x100] sm:$0xff] %v130
        %v132 = vld [vmem:[%s64 + $0x108] sm:$0xff]
        %133 = vst [vmem:[%s65 + $0x108] sm:$0xff] %v132
        %v134 = vld [vmem:[%s64 + $0x110] sm:$0xff]
        %135 = vst [vmem:[%s65 + $0x110] sm:$0xff] %v134
        %v136 = vld [vmem:[%s64 + $0x118] sm:$0xff]
        %137 = vst [vmem:[%s65 + $0x118] sm:$0xff] %v136
        %v138 = vld [vmem:[%s64 + $0x120] sm:$0xff]
        %139 = vst [vmem:[%s65 + $0x120] sm:$0xff] %v138
        %v140 = vld [vmem:[%s64 + $0x128] sm:$0xff]
        %141 = vst [vmem:[%s65 + $0x128] sm:$0xff] %v140
        %v142 = vld [vmem:[%s64 + $0x130] sm:$0xff]
        %143 = vst [vmem:[%s65 + $0x130] sm:$0xff] %v142
        %v144 = vld [vmem:[%s64 + $0x138] sm:$0xff]
        %145 = vst [vmem:[%s65 + $0x138] sm:$0xff] %v144
        %v146 = vld [vmem:[%s64 + $0x140] sm:$0xff]
        %147 = vst [vmem:[%s65 + $0x140] sm:$0xff] %v146
        %v148 = vld [vmem:[%s64 + $0x148] sm:$0xff]
        %149 = vst [vmem:[%s65 + $0x148] sm:$0xff] %v148
        %v150 = vld [vmem:[%s64 + $0x150] sm:$0xff]
        %151 = vst [vmem:[%s65 + $0x150] sm:$0xff] %v150
        %v152 = vld [vmem:[%s64 + $0x158] sm:$0xff]
        %153 = vst [vmem:[%s65 + $0x158] sm:$0xff] %v152
        %v154 = vld [vmem:[%s64 + $0x160] sm:$0xff]
        %155 = vst [vmem:[%s65 + $0x160] sm:$0xff] %v154
        %v156 = vld [vmem:[%s64 + $0x168] sm:$0xff]
        %157 = vst [vmem:[%s65 + $0x168] sm:$0xff] %v156
        %v158 = vld [vmem:[%s64 + $0x170] sm:$0xff]
        %159 = vst [vmem:[%s65 + $0x170] sm:$0xff] %v158
        %v160 = vld [vmem:[%s64 + $0x178] sm:$0xff]
        %161 = vst [vmem:[%s65 + $0x178] sm:$0xff] %v160
        %v162 = vld [vmem:[%s64 + $0x180] sm:$0xff]
        %163 = vst [vmem:[%s65 + $0x180] sm:$0xff] %v162
        %v164 = vld [vmem:[%s64 + $0x188] sm:$0xff]
        %165 = vst [vmem:[%s65 + $0x188] sm:$0xff] %v164
      $region57: #{wake_word_forward.1} parent=51 // loop_footer
        %s63 = sadd.s32 1, %s59
      $region58: #{wake_word_forward.1} parent=51 // loop_footer_branch
        %58 = sbr.rel target = $region54
      $region59: #{wake_word_forward.1} parent=51 // loop_exit
        _
    $region52: #{wake_word_forward.1} parent=36 // pred_fallthru
      _
    %p166 = pneg %p54
    // Predicated region
    $region60: #{wake_word_forward.1} parent=36 // pred_check
      _
    $region61: #{wake_word_forward.1} parent=36 // pred_check_branch
      %168 = sbr.rel (%p54) target = $region63
    $region62: #{wake_word_forward.1} parent=36 // pred_region
      %s169 = sand.u32 400, 7
    $region63: #{wake_word_forward.1} parent=36 // pred_fallthru
      _
  $region37: #{wake_word_forward.1} parent=0 // pred_fallthru
    _
  // Predicated region
  $region38: #{wake_word_forward.1} parent=0 // pred_check
    %p38 = pneg %p34
  $region39: #{wake_word_forward.1} parent=0 // pred_check_branch
    %40 = sbr.rel (%p38) target = $region41
  $region40: #{wake_word_forward.1} parent=0 // pred_region
    %s41 = sshll.u32 1, 400
    %s42 = ssub.s32 %s41, 1
    loop: start=0, step=1, limit=1
    $region42: #{wake_word_forward.1} parent=40 // loop_pre_header
      _
    $region43: #{wake_word_forward.1} parent=40 // loop_header
      %s44 = sphi 0, %s48
      %p45 = scmp.ge.s32.totalorder %s44, 1
      %s49 = sphi %s8, %s8
      %s50 = sphi [#allocation2], [#allocation2]
    $region44: #{wake_word_forward.1} parent=40 // loop_header_branch
      %47 = sbr.rel (%p45) target = $region48
    $region45: #{wake_word_forward.1} parent=40 // loop_body
      %v51 = vld [vmem:[%s49] sm:%s42]
      %52 = vst [vmem:[%s50] sm:%s42] %v51
    $region46: #{wake_word_forward.1} parent=40 // loop_footer
      %s48 = sadd.s32 1, %s44
    $region47: #{wake_word_forward.1} parent=40 // loop_footer_branch
      %43 = sbr.rel target = $region43
    $region48: #{wake_word_forward.1} parent=40 // loop_exit
      _
  $region41: #{wake_word_forward.1} parent=0 // pred_fallthru
    _
  // Predicated region
  $region64: #{wake_word_forward.1} parent=0 // pred_check
    _
  $region65: #{wake_word_forward.1} parent=0 // pred_check_branch
    %172 = sbr.rel (0) target = $region67
  $region66: #{wake_word_forward.1} parent=0 // pred_region
    %173 = vsyncadd [#allocation3], 6400
  $region67: #{wake_word_forward.1} parent=0 // pred_fallthru
    _
  %v174 = vld [vmem:[%s1] sm:$0xff]
  %v175 = vld [vmem:[%s1 + $0x8] sm:$0xff]
  %v176 = vld [vmem:[%s1 + $0x10] sm:$0xff]
  %v177 = vld [vmem:[%s1 + $0x18] sm:$0xff]
  %v178 = vld [vmem:[%s0] sm:$0xff]
  %v179 = vld [vmem:[%s0 + $0x8] sm:$0xff]
  %v180 = vld [vmem:[%s0 + $0x10] sm:$0xff]
  %v181 = vld [vmem:[%s0 + $0x18] sm:$0xff]
  %v182 = vld [vmem:[%s0 + $0x20] sm:$0xff]
  %v183 = vld [vmem:[%s0 + $0x28] sm:$0xff]
  %v184 = vld [vmem:[%s0 + $0x30] sm:$0xff]
  %v185 = vld [vmem:[%s0 + $0x38] sm:$0xff]
  %v186 = vld [vmem:[%s0 + $0x40] sm:$0x7f]
  %v187 = vld [vmem:[%s0 + $0x48] sm:$0x7f]
  %v188 = vld [vmem:[%s2] sm:$0xff]
  %v189 = vld [vmem:[%s2 + $0x8] sm:$0xff]
  %v190 = vld [vmem:[%s2 + $0x10] sm:$0xff]
  %v191 = vld [vmem:[%s2 + $0x18] sm:$0xff]
  %193 = vset.pattern.permute.xlu0 0
  %194 = vperm.xlu0 %193, %v188
  %v195 = vpop.permute.xlu0 %194
  %198 = vset.pattern.permute.xlu0 0
  %199 = vperm.xlu0 %198, %v189
  %v200 = vpop.permute.xlu0 %199
  %203 = vset.pattern.permute.xlu0 0
  %204 = vperm.xlu0 %203, %v190
  %v205 = vpop.permute.xlu0 %204
  %208 = vset.pattern.permute.xlu0 0
  %209 = vperm.xlu0 %208, %v191
  %v210 = vpop.permute.xlu0 %209
  %vm212 = vcmask 318464
  %v214 = vsel %vm212, %v174, 0
  %v217 = vsel %vm212, %v175, 0
  %v220 = vsel %vm212, %v176, 0
  %v223 = vsel %vm212, %v177, 0
  %vm225 = vcmask 1046528
  %v227 = vsel %vm225, %v186, 0
  %v230 = vsel %vm225, %v187, 0
  %232 = vmatprep.subr.mxu0 0.0
  %233 = vmatpush1.msra.mxu0 0.0
  %234 = vmatprep.subr.mxu0 0.0
  %235 = vmatpush1.msra.mxu0 0.0
  %236 = vmatprep.subr.mxu0 0.0
  %237 = vmatpush1.msra.mxu0 0.0
  %238 = vmatprep.subr.mxu0 0.0
  %239 = vmatpush1.msra.mxu0 0.0
  %240 = vmatprep.subr.mxu0 0.0
  %241 = vmatpush1.msra.mxu0 0.0
  %242 = vmatprep.subr.mxu0 0.0
  %243 = vmatpush1.msra.mxu0 0.0
  %244 = vmatprep.subr.mxu0 0.0
  %245 = vmatpush1.msra.mxu0 0.0
  %246 = vmatprep.subr.mxu0 0.0
  %247 = vmatpush1.msra.mxu0 0.0
  %248 = vmatprep.subr.mxu0 0.0
  %249 = vmatpush1.msra.mxu0 0.0
  %250 = vmatprep.subr.mxu0 0.0
  %251 = vmatpush1.msra.mxu0 0.0
  %252 = vmatprep.subr.mxu0 0.0
  %253 = vmatpush1.msra.mxu0 0.0
  %254 = vmatprep.subr.mxu0 %v230
  %255 = vmatpush1.msra.mxu0 %v227
  %256 = vmatprep.subr.mxu0 %v185
  %257 = vmatpush1.msra.mxu0 %v184
  %258 = vmatprep.subr.mxu0 %v183
  %259 = vmatpush1.msra.mxu0 %v182
  %260 = vmatprep.subr.mxu0 %v181
  %261 = vmatpush1.msra.mxu0 %v180
  %262 = vmatprep.subr.mxu0 %v179
  %263 = vmatpush1.msra.mxu0 %v178
  %264 = vmatprep.subr.mxu0 0.0
  %265 = vmatpush2.msra.mxu0 0.0
  %266 = vmatprep.subr.mxu0 0.0
  %267 = vmatpush2.msra.mxu0 0.0
  %268 = vmatprep.subr.mxu0 0.0
  %269 = vmatpush2.msra.mxu0 0.0
  %270 = vmatprep.subr.mxu0 0.0
  %271 = vmatpush2.msra.mxu0 0.0
  %272 = vmatprep.subr.mxu0 0.0
  %273 = vmatpush2.msra.mxu0 0.0
  %274 = vmatprep.subr.mxu0 0.0
  %275 = vmatpush2.msra.mxu0 0.0
  %276 = vmatprep.subr.mxu0 0.0
  %277 = vmatpush2.msra.mxu0 0.0
  %278 = vmatprep.subr.mxu0 0.0
  %279 = vmatpush2.msra.mxu0 0.0
  %280 = vmatprep.subr.mxu0 0.0
  %281 = vmatpush2.msra.mxu0 0.0
  %282 = vmatprep.subr.mxu0 0.0
  %283 = vmatpush2.msra.mxu0 0.0
  %284 = vmatprep.subr.mxu0 0.0
  %285 = vmatpush2.msra.mxu0 0.0
  %286 = vmatprep.subr.mxu0 0.0
  %287 = vmatpush2.msra.mxu0 0.0
  %288 = vmatprep.subr.mxu0 0.0
  %289 = vmatpush2.msra.mxu0 0.0
  %290 = vmatprep.subr.mxu0 0.0
  %291 = vmatpush2.msra.mxu0 0.0
  %292 = vmatprep.subr.mxu0 0.0
  %293 = vmatpush2.msra.mxu0 0.0
  %294 = vmatprep.subr.mxu0 0.0
  %295 = vmatpush2.msra.mxu0 0.0
  %296 = vmatprep.mubr.f32.mxu0 0.0
  %297 = vmatmul.mubr.f32.gmra.mxu0 %v214
  %v298 = vpop.f32.mrf.mxu0
  %v299 = vadd.f32 %v195, %v298
  %v300 = vpop.f32.mrf.mxu0
  %v301 = vadd.f32 %v195, %v300
  %302 = vmatprep.mubr.f32.mxu0 0.0
  %303 = vmatmul.mubr.f32.gmra.mxu0 %v217
  %v304 = vpop.f32.mrf.mxu0
  %v305 = vadd.f32 %v200, %v304
  %v306 = vpop.f32.mrf.mxu0
  %v307 = vadd.f32 %v200, %v306
  %308 = vmatprep.mubr.f32.mxu0 0.0
  %309 = vmatmul.mubr.f32.gmra.mxu0 %v220
  %v310 = vpop.f32.mrf.mxu0
  %v311 = vadd.f32 %v205, %v310
  %v312 = vpop.f32.mrf.mxu0
  %v313 = vadd.f32 %v205, %v312
  %314 = vmatprep.mubr.f32.mxu0 0.0
  %315 = vmatmul.mubr.f32.gmra.mxu0 %v223
  %v316 = vpop.f32.mrf.mxu0
  %v317 = vadd.f32 %v210, %v316
  %v318 = vpop.f32.mrf.mxu0
  %v319 = vadd.f32 %v210, %v318
  %320 = vdwg.mxu0
  %v321 = vmax.f32 %v299, 0.0
  %v322 = vmax.f32 %v301, 0.0
  %v323 = vmax.f32 %v305, 0.0
  %v324 = vmax.f32 %v307, 0.0
  %v325 = vmax.f32 %v311, 0.0
  %v326 = vmax.f32 %v313, 0.0
  %v327 = vmax.f32 %v317, 0.0
  %v328 = vmax.f32 %v319, 0.0
  %337 = vrot.lane.b32.xlu0 %v321, 127
  %v338 = vpop.permute.xlu0 %337
  %339 = vrot.lane.b32.xlu0 %v322, 127
  %v340 = vpop.permute.xlu0 %339
  %341 = vrot.lane.b32.xlu0 %v323, 127
  %v342 = vpop.permute.xlu0 %341
  %343 = vrot.lane.b32.xlu0 %v324, 127
  %v344 = vpop.permute.xlu0 %343
  %345 = vrot.lane.b32.xlu0 %v325, 127
  %v346 = vpop.permute.xlu0 %345
  %347 = vrot.lane.b32.xlu0 %v326, 127
  %v348 = vpop.permute.xlu0 %347
  %349 = vrot.lane.b32.xlu0 %v327, 127
  %v350 = vpop.permute.xlu0 %349
  %351 = vrot.lane.b32.xlu0 %v328, 127
  %v352 = vpop.permute.xlu0 %351
  %vm353 = vcmask 1039360
  %v354 = vsel %vm353, %v338, %v340
  %v355 = vsel %vm353, %v342, %v344
  %v356 = vsel %vm353, %v346, %v348
  %v357 = vsel %vm353, %v350, %v352
  %v366 = vmax.f32 %v321, %v354
  %v367 = vmax.f32 %v322, %v340
  %v368 = vmax.f32 %v323, %v355
  %v369 = vmax.f32 %v324, %v344
  %v370 = vmax.f32 %v325, %v356
  %v371 = vmax.f32 %v326, %v348
  %v372 = vmax.f32 %v327, %v357
  %v373 = vmax.f32 %v328, %v352
  %374 = vrot.lane.b32.xlu0 %v321, 126
  %v375 = vpop.permute.xlu0 %374
  %376 = vrot.lane.b32.xlu0 %v322, 126
  %v377 = vpop.permute.xlu0 %376
  %378 = vrot.lane.b32.xlu0 %v323, 126
  %v379 = vpop.permute.xlu0 %378
  %380 = vrot.lane.b32.xlu0 %v324, 126
  %v381 = vpop.permute.xlu0 %380
  %382 = vrot.lane.b32.xlu0 %v325, 126
  %v383 = vpop.permute.xlu0 %382
  %384 = vrot.lane.b32.xlu0 %v326, 126
  %v385 = vpop.permute.xlu0 %384
  %386 = vrot.lane.b32.xlu0 %v327, 126
  %v387 = vpop.permute.xlu0 %386
  %388 = vrot.lane.b32.xlu0 %v328, 126
  %v389 = vpop.permute.xlu0 %388
  %vm390 = vcmask 1031168
  %v391 = vsel %vm390, %v375, %v377
  %v392 = vsel %vm390, %v379, %v381
  %v393 = vsel %vm390, %v383, %v385
  %v394 = vsel %vm390, %v387, %v389
  %v403 = vmax.f32 %v366, %v391
  %v404 = vmax.f32 %v367, %v377
  %v405 = vmax.f32 %v368, %v392
  %v406 = vmax.f32 %v369, %v381
  %v407 = vmax.f32 %v370, %v393
  %v408 = vmax.f32 %v371, %v385
  %v409 = vmax.f32 %v372, %v394
  %v410 = vmax.f32 %v373, %v389
  %v411 = vpack.c.bf16 %v405, %v403
  %v412 = vpack.c.bf16 %v406, %v404
  %v413 = vpack.c.bf16 %v409, %v407
  %v414 = vpack.c.bf16 %v410, %v408
  %v415 = vld [vmem:[%s3] sm:$0xf]
  %v416 = vld [vmem:[%s3 + $0x4] sm:$0xf]
  %v417 = vld [vmem:[%s3 + $0x8] sm:$0xf]
  %v418 = vld [vmem:[%s3 + $0xc] sm:$0xf]
  %v419 = vld [vmem:[%s3 + $0x10] sm:$0xf]
  %v420 = vld [vmem:[%s3 + $0x14] sm:$0xf]
  %v421 = vld [vmem:[%s3 + $0x18] sm:$0xf]
  %v422 = vld [vmem:[%s3 + $0x1c] sm:$0xf]
  %v423 = vld [vmem:[%s3 + $0x20] sm:$0xf]
  %v424 = vld [vmem:[%s3 + $0x24] sm:$0xf]
  %v425 = vld [vmem:[%s3 + $0x28] sm:$0xf]
  %v426 = vld [vmem:[%s3 + $0x2c] sm:$0xf]
  %v427 = vld [vmem:[%s3 + $0x30] sm:$0xf]
  %v428 = vld [vmem:[%s3 + $0x34] sm:$0xf]
  %v429 = vld [vmem:[%s3 + $0x38] sm:$0xf]
  %v430 = vld [vmem:[%s3 + $0x3c] sm:$0xf]
  %v431 = vld [vmem:[%s3 + $0x40] sm:$0xf]
  %v432 = vld [vmem:[%s3 + $0x44] sm:$0xf]
  %v433 = vld [vmem:[%s3 + $0x48] sm:$0xf]
  %v434 = vld [vmem:[%s3 + $0x4c] sm:$0xf]
  %v435 = vld [vmem:[%s3 + $0x50] sm:$0xf]
  %v436 = vld [vmem:[%s3 + $0x54] sm:$0xf]
  %v437 = vld [vmem:[%s3 + $0x58] sm:$0xf]
  %v438 = vld [vmem:[%s3 + $0x5c] sm:$0xf]
  %v439 = vld [vmem:[%s3 + $0x60] sm:$0xf]
  %v440 = vld [vmem:[%s3 + $0x64] sm:$0x1]
  %v467 = vunpack.c.l.b16 %v415
  %v468 = vunpack.c.l.b16 %v416
  %v469 = vunpack.c.l.b16 %v417
  %v470 = vunpack.c.l.b16 %v418
  %v471 = vunpack.c.l.b16 %v419
  %v472 = vunpack.c.l.b16 %v420
  %v473 = vunpack.c.l.b16 %v421
  %v474 = vunpack.c.l.b16 %v422
  %v475 = vunpack.c.l.b16 %v423
  %v476 = vunpack.c.l.b16 %v424
  %v477 = vunpack.c.l.b16 %v425
  %v478 = vunpack.c.l.b16 %v426
  %v479 = vunpack.c.l.b16 %v427
  %v480 = vunpack.c.l.b16 %v428
  %v481 = vunpack.c.l.b16 %v429
  %v482 = vunpack.c.l.b16 %v430
  %v483 = vunpack.c.l.b16 %v431
  %v484 = vunpack.c.l.b16 %v432
  %v485 = vunpack.c.l.b16 %v433
  %v486 = vunpack.c.l.b16 %v434
  %v487 = vunpack.c.l.b16 %v435
  %v488 = vunpack.c.l.b16 %v436
  %v489 = vunpack.c.l.b16 %v437
  %v490 = vunpack.c.l.b16 %v438
  %v491 = vunpack.c.l.b16 %v439
  %v492 = vunpack.c.l.b16 %v440
  %v493 = vpack.c.b16 %v468, %v467
  %v494 = vpack.c.b16 %v470, %v469
  %v495 = vpack.c.b16 %v472, %v471
  %v496 = vpack.c.b16 %v474, %v473
  %v497 = vpack.c.b16 %v476, %v475
  %v498 = vpack.c.b16 %v478, %v477
  %v499 = vpack.c.b16 %v480, %v479
  %v500 = vpack.c.b16 %v482, %v481
  %v501 = vpack.c.b16 %v484, %v483
  %v502 = vpack.c.b16 %v486, %v485
  %v503 = vpack.c.b16 %v488, %v487
  %v504 = vpack.c.b16 %v490, %v489
  %v505 = vpack.c.b16 %v492, %v491
  %vm518 = vcmask 605184
  %v520 = vsel %vm518, %v412, 0
  %v523 = vsel %vm518, %v414, 0
  %vm525 = vcmask 1044480
  %v527 = vsel %vm525, %v505, 0
  %529 = vmatprep.subr.bf16.mxu0 0
  %530 = vmatpush1.bf16.msra.mxu0 %v500
  %531 = vmatprep.subr.bf16.mxu0 0
  %532 = vmatpush1.bf16.msra.mxu0 %v499
  %533 = vmatprep.subr.bf16.mxu0 0
  %534 = vmatpush1.bf16.msra.mxu0 %v498
  %535 = vmatprep.subr.bf16.mxu0 0
  %536 = vmatpush1.bf16.msra.mxu0 %v497
  %537 = vmatprep.subr.bf16.mxu0 0
  %538 = vmatpush1.bf16.msra.mxu0 %v496
  %539 = vmatprep.subr.bf16.mxu0 0
  %540 = vmatpush1.bf16.msra.mxu0 %v495
  %541 = vmatprep.subr.bf16.mxu0 0
  %542 = vmatpush1.bf16.msra.mxu0 %v494
  %543 = vmatprep.subr.bf16.mxu0 0
  %544 = vmatpush1.bf16.msra.mxu0 %v493
  %545 = vmatprep.subr.bf16.mxu0 0
  %546 = vmatpush2.bf16.msra.mxu0 0
  %547 = vmatprep.subr.bf16.mxu0 0
  %548 = vmatpush2.bf16.msra.mxu0 0
  %549 = vmatprep.subr.bf16.mxu0 0
  %550 = vmatpush2.bf16.msra.mxu0 0
  %551 = vmatprep.subr.bf16.mxu0 0
  %552 = vmatpush2.bf16.msra.mxu0 %v527
  %553 = vmatprep.subr.bf16.mxu0 0
  %554 = vmatpush2.bf16.msra.mxu0 %v504
  %555 = vmatprep.subr.bf16.mxu0 0
  %556 = vmatpush2.bf16.msra.mxu0 %v503
  %557 = vmatprep.subr.bf16.mxu0 0
  %558 = vmatpush2.bf16.msra.mxu0 %v502
  %559 = vmatprep.subr.bf16.mxu0 0
  %560 = vmatpush2.bf16.msra.mxu0 %v501
  %561 = vmatprep.mubr.bf16.mxu0 %v520
  %562 = vmatmul.mubr.bf16.gmra.mxu0 %v411
  %v563 = vpop.f32.mrf.mxu0
  %v564 = vadd.f32 0.0, %v563
  %v565 = vpop.f32.mrf.mxu0
  %v566 = vpop.f32.mrf.mxu0
  %v567 = vadd.f32 0.0, %v566
  %v568 = vpop.f32.mrf.mxu0
  %569 = vmatprep.mubr.bf16.mxu0 %v523
  %570 = vmatmul.mubr.bf16.gmra.mxu0 %v413
  %v571 = vpop.f32.mrf.mxu0
  %v572 = vadd.f32 0.0, %v571
  %v573 = vpop.f32.mrf.mxu0
  %v574 = vpop.f32.mrf.mxu0
  %v575 = vadd.f32 0.0, %v574
  %v576 = vpop.f32.mrf.mxu0
  %577 = vdwg.mxu0
  %579 = vrot.lane.b32.xlu0 %v567, 50
  %v580 = vpop.permute.xlu0 %579
  %583 = vrot.lane.b32.xlu0 %v572, 100
  %v584 = vpop.permute.xlu0 %583
  %587 = vrot.lane.b32.xlu0 %v575, 22
  %v588 = vpop.permute.xlu0 %587
  %vm590 = vcmask 408576
  %v591 = vsel %vm590, %v564, %v580
  %vm592 = vcmask 818176
  %v593 = vsel %vm592, %v591, %v584
  %vm594 = vcmask 179200
  %v595 = vsel %vm594, %v584, %v588
  %597 = vrot.lane.b32.xlu0 %v564, 78
  %v598 = vpop.permute.xlu0 %597
  %600 = vrot.lane.b32.xlu0 %v572, 50
  %v601 = vpop.permute.xlu0 %600
  %603 = vrot.lane.b32.xlu0 %v575, 100
  %v604 = vpop.permute.xlu0 %603
  %v606 = vsel %vm590, %v598, %v567
  %v607 = vsel %vm592, %v606, %v601
  %v608 = vsel %vm594, %v601, %v604
  %v609 = vpack.c.bf16 %v607, %v593
  %v610 = vpack.c.bf16 %v608, %v595
  %s611 = smul.u32 4, 25
  %s612 = smul.u32 %s611, 4
  %s613 = sshll.u32 %s612, 4
  %614 = dma.done [#allocation3], %s613
  %v615 = vld [vmem:[#allocation2] sm:$0xff]
  %v616 = vld [vmem:[#allocation2 + $0x8] sm:$0xff]
  %v617 = vld [vmem:[#allocation2 + $0x10] sm:$0xff]
  %v618 = vld [vmem:[#allocation2 + $0x18] sm:$0xff]
  %v619 = vld [vmem:[#allocation2 + $0x20] sm:$0xff]
  %v620 = vld [vmem:[#allocation2 + $0x28] sm:$0xff]
  %v621 = vld [vmem:[#allocation2 + $0x30] sm:$0xff]
  %v622 = vld [vmem:[#allocation2 + $0x38] sm:$0xff]
  %v623 = vld [vmem:[#allocation2 + $0x40] sm:$0xff]
  %v624 = vld [vmem:[#allocation2 + $0x48] sm:$0xff]
  %v625 = vld [vmem:[#allocation2 + $0x50] sm:$0xff]
  %v626 = vld [vmem:[#allocation2 + $0x58] sm:$0xff]
  %v627 = vld [vmem:[#allocation2 + $0x60] sm:$0xff]
  %v628 = vld [vmem:[#allocation2 + $0x68] sm:$0xff]
  %v629 = vld [vmem:[#allocation2 + $0x70] sm:$0xff]
  %v630 = vld [vmem:[#allocation2 + $0x78] sm:$0xff]
  %v631 = vld [vmem:[#allocation2 + $0x80] sm:$0xff]
  %v632 = vld [vmem:[#allocation2 + $0x88] sm:$0xff]
  %v633 = vld [vmem:[#allocation2 + $0x90] sm:$0xff]
  %v634 = vld [vmem:[#allocation2 + $0x98] sm:$0xff]
  %v635 = vld [vmem:[#allocation2 + $0xa0] sm:$0xff]
  %v636 = vld [vmem:[#allocation2 + $0xa8] sm:$0xff]
  %v637 = vld [vmem:[#allocation2 + $0xb0] sm:$0xff]
  %v638 = vld [vmem:[#allocation2 + $0xb8] sm:$0xff]
  %v639 = vld [vmem:[#allocation2 + $0xc0] sm:$0xff]
  %v640 = vld [vmem:[#allocation2 + $0xc8] sm:$0xff]
  %v641 = vld [vmem:[#allocation2 + $0xd0] sm:$0xff]
  %v642 = vld [vmem:[#allocation2 + $0xd8] sm:$0xff]
  %v643 = vld [vmem:[#allocation2 + $0xe0] sm:$0xff]
  %v644 = vld [vmem:[#allocation2 + $0xe8] sm:$0xff]
  %v645 = vld [vmem:[#allocation2 + $0xf0] sm:$0xff]
  %v646 = vld [vmem:[#allocation2 + $0xf8] sm:$0xff]
  %v647 = vld [vmem:[#allocation2 + $0x100] sm:$0xff]
  %v648 = vld [vmem:[#allocation2 + $0x108] sm:$0xff]
  %v649 = vld [vmem:[#allocation2 + $0x110] sm:$0xff]
  %v650 = vld [vmem:[#allocation2 + $0x118] sm:$0xff]
  %v651 = vld [vmem:[#allocation2 + $0x120] sm:$0xff]
  %v652 = vld [vmem:[#allocation2 + $0x128] sm:$0xff]
  %v653 = vld [vmem:[#allocation2 + $0x130] sm:$0xff]
  %v654 = vld [vmem:[#allocation2 + $0x138] sm:$0xff]
  %v655 = vld [vmem:[#allocation2 + $0x140] sm:$0xff]
  %v656 = vld [vmem:[#allocation2 + $0x148] sm:$0xff]
  %v657 = vld [vmem:[#allocation2 + $0x150] sm:$0xff]
  %v658 = vld [vmem:[#allocation2 + $0x158] sm:$0xff]
  %v659 = vld [vmem:[#allocation2 + $0x160] sm:$0xff]
  %v660 = vld [vmem:[#allocation2 + $0x168] sm:$0xff]
  %v661 = vld [vmem:[#allocation2 + $0x170] sm:$0xff]
  %v662 = vld [vmem:[#allocation2 + $0x178] sm:$0xff]
  %v663 = vld [vmem:[#allocation2 + $0x180] sm:$0xff]
  %v664 = vld [vmem:[#allocation2 + $0x188] sm:$0xff]
  %v715 = vunpack.c.l.b16 %v615
  %v716 = vunpack.c.h.b16 %v615
  %v717 = vunpack.c.l.b16 %v616
  %v718 = vunpack.c.h.b16 %v616
  %v719 = vunpack.c.l.b16 %v617
  %v720 = vunpack.c.h.b16 %v617
  %v721 = vunpack.c.l.b16 %v618
  %v722 = vunpack.c.h.b16 %v618
  %v723 = vunpack.c.l.b16 %v619
  %v724 = vunpack.c.h.b16 %v619
  %v725 = vunpack.c.l.b16 %v620
  %v726 = vunpack.c.h.b16 %v620
  %v727 = vunpack.c.l.b16 %v621
  %v728 = vunpack.c.h.b16 %v621
  %v729 = vunpack.c.l.b16 %v622
  %v730 = vunpack.c.h.b16 %v622
  %v731 = vunpack.c.l.b16 %v623
  %v732 = vunpack.c.h.b16 %v623
  %v733 = vunpack.c.l.b16 %v624
  %v734 = vunpack.c.h.b16 %v624
  %v735 = vunpack.c.l.b16 %v625
  %v736 = vunpack.c.h.b16 %v625
  %v737 = vunpack.c.l.b16 %v626
  %v738 = vunpack.c.h.b16 %v626
  %v739 = vunpack.c.l.b16 %v627
  %v740 = vunpack.c.h.b16 %v627
  %v741 = vunpack.c.l.b16 %v628
  %v742 = vunpack.c.h.b16 %v628
  %v743 = vunpack.c.l.b16 %v629
  %v744 = vunpack.c.h.b16 %v629
  %v745 = vunpack.c.l.b16 %v630
  %v746 = vunpack.c.h.b16 %v630
  %v747 = vunpack.c.l.b16 %v631
  %v748 = vunpack.c.h.b16 %v631
  %v749 = vunpack.c.l.b16 %v632
  %v750 = vunpack.c.h.b16 %v632
  %v751 = vunpack.c.l.b16 %v633
  %v752 = vunpack.c.h.b16 %v633
  %v753 = vunpack.c.l.b16 %v634
  %v754 = vunpack.c.h.b16 %v634
  %v755 = vunpack.c.l.b16 %v635
  %v756 = vunpack.c.h.b16 %v635
  %v757 = vunpack.c.l.b16 %v636
  %v758 = vunpack.c.h.b16 %v636
  %v759 = vunpack.c.l.b16 %v637
  %v760 = vunpack.c.h.b16 %v637
  %v761 = vunpack.c.l.b16 %v638
  %v762 = vunpack.c.h.b16 %v638
  %v763 = vunpack.c.l.b16 %v639
  %v764 = vunpack.c.h.b16 %v639
  %v765 = vunpack.c.l.b16 %v640
  %v766 = vunpack.c.h.b16 %v640
  %v767 = vunpack.c.l.b16 %v641
  %v768 = vunpack.c.h.b16 %v641
  %v769 = vunpack.c.l.b16 %v642
  %v770 = vunpack.c.h.b16 %v642
  %v771 = vunpack.c.l.b16 %v643
  %v772 = vunpack.c.h.b16 %v643
  %v773 = vunpack.c.l.b16 %v644
  %v774 = vunpack.c.h.b16 %v644
  %v775 = vunpack.c.l.b16 %v645
  %v776 = vunpack.c.h.b16 %v645
  %v777 = vunpack.c.l.b16 %v646
  %v778 = vunpack.c.h.b16 %v646
  %v779 = vunpack.c.l.b16 %v647
  %v780 = vunpack.c.h.b16 %v647
  %v781 = vunpack.c.l.b16 %v648
  %v782 = vunpack.c.h.b16 %v648
  %v783 = vunpack.c.l.b16 %v649
  %v784 = vunpack.c.h.b16 %v649
  %v785 = vunpack.c.l.b16 %v650
  %v786 = vunpack.c.h.b16 %v650
  %v787 = vunpack.c.l.b16 %v651
  %v788 = vunpack.c.h.b16 %v651
  %v789 = vunpack.c.l.b16 %v652
  %v790 = vunpack.c.h.b16 %v652
  %v791 = vunpack.c.l.b16 %v653
  %v792 = vunpack.c.h.b16 %v653
  %v793 = vunpack.c.l.b16 %v654
  %v794 = vunpack.c.h.b16 %v654
  %v795 = vunpack.c.l.b16 %v655
  %v796 = vunpack.c.h.b16 %v655
  %v797 = vunpack.c.l.b16 %v656
  %v798 = vunpack.c.h.b16 %v656
  %v799 = vunpack.c.l.b16 %v657
  %v800 = vunpack.c.h.b16 %v657
  %v801 = vunpack.c.l.b16 %v658
  %v802 = vunpack.c.h.b16 %v658
  %v803 = vunpack.c.l.b16 %v659
  %v804 = vunpack.c.h.b16 %v659
  %v805 = vunpack.c.l.b16 %v660
  %v806 = vunpack.c.h.b16 %v660
  %v807 = vunpack.c.l.b16 %v661
  %v808 = vunpack.c.h.b16 %v661
  %v809 = vunpack.c.l.b16 %v662
  %v810 = vunpack.c.h.b16 %v662
  %v811 = vunpack.c.l.b16 %v663
  %v812 = vunpack.c.h.b16 %v663
  %v813 = vunpack.c.l.b16 %v664
  %v814 = vunpack.c.h.b16 %v664
  %v815 = vpack.c.b16 %v719, %v715
  %v816 = vpack.c.b16 %v720, %v716
  %v817 = vpack.c.b16 %v721, %v717
  %v818 = vpack.c.b16 %v722, %v718
  %v819 = vpack.c.b16 %v727, %v723
  %v820 = vpack.c.b16 %v728, %v724
  %v821 = vpack.c.b16 %v729, %v725
  %v822 = vpack.c.b16 %v730, %v726
  %v823 = vpack.c.b16 %v735, %v731
  %v824 = vpack.c.b16 %v736, %v732
  %v825 = vpack.c.b16 %v737, %v733
  %v826 = vpack.c.b16 %v738, %v734
  %v827 = vpack.c.b16 %v743, %v739
  %v828 = vpack.c.b16 %v744, %v740
  %v829 = vpack.c.b16 %v745, %v741
  %v830 = vpack.c.b16 %v746, %v742
  %v831 = vpack.c.b16 %v751, %v747
  %v832 = vpack.c.b16 %v752, %v748
  %v833 = vpack.c.b16 %v753, %v749
  %v834 = vpack.c.b16 %v754, %v750
  %v835 = vpack.c.b16 %v759, %v755
  %v836 = vpack.c.b16 %v760, %v756
  %v837 = vpack.c.b16 %v761, %v757
  %v838 = vpack.c.b16 %v762, %v758
  %v839 = vpack.c.b16 %v767, %v763
  %v840 = vpack.c.b16 %v768, %v764
  %v841 = vpack.c.b16 %v769, %v765
  %v842 = vpack.c.b16 %v770, %v766
  %v843 = vpack.c.b16 %v775, %v771
  %v844 = vpack.c.b16 %v776, %v772
  %v845 = vpack.c.b16 %v777, %v773
  %v846 = vpack.c.b16 %v778, %v774
  %v847 = vpack.c.b16 %v783, %v779
  %v848 = vpack.c.b16 %v784, %v780
  %v849 = vpack.c.b16 %v785, %v781
  %v850 = vpack.c.b16 %v786, %v782
  %v851 = vpack.c.b16 %v791, %v787
  %v852 = vpack.c.b16 %v792, %v788
  %v853 = vpack.c.b16 %v793, %v789
  %v854 = vpack.c.b16 %v794, %v790
  %v855 = vpack.c.b16 %v799, %v795
  %v856 = vpack.c.b16 %v800, %v796
  %v857 = vpack.c.b16 %v801, %v797
  %v858 = vpack.c.b16 %v802, %v798
  %v859 = vpack.c.b16 %v807, %v803
  %v860 = vpack.c.b16 %v808, %v804
  %v861 = vpack.c.b16 %v809, %v805
  %v862 = vpack.c.b16 %v810, %v806
  %v863 = vpack.c.b16 %v811, %v811
  %v864 = vpack.c.b16 %v812, %v812
  %v865 = vpack.c.b16 %v813, %v813
  %v866 = vpack.c.b16 %v814, %v814
  %vm915 = vcmask 588800
  %v917 = vsel %vm915, %v610, 0
  %vm919 = vcmask 1043456
  %v921 = vsel %vm919, %v863, 0
  %v924 = vsel %vm919, %v864, 0
  %v927 = vsel %vm919, %v865, 0
  %v930 = vsel %vm919, %v866, 0
  %932 = vmatprep.subr.bf16.mxu0 %v844
  %933 = vmatpush1.bf16.msra.mxu0 %v843
  %934 = vmatprep.subr.bf16.mxu0 %v840
  %935 = vmatpush1.bf16.msra.mxu0 %v839
  %936 = vmatprep.subr.bf16.mxu0 %v836
  %937 = vmatpush1.bf16.msra.mxu0 %v835
  %938 = vmatprep.subr.bf16.mxu0 %v832
  %939 = vmatpush1.bf16.msra.mxu0 %v831
  %940 = vmatprep.subr.bf16.mxu0 %v828
  %941 = vmatpush1.bf16.msra.mxu0 %v827
  %942 = vmatprep.subr.bf16.mxu0 %v824
  %943 = vmatpush1.bf16.msra.mxu0 %v823
  %944 = vmatprep.subr.bf16.mxu0 %v820
  %945 = vmatpush1.bf16.msra.mxu0 %v819
  %946 = vmatprep.subr.bf16.mxu0 %v816
  %947 = vmatpush1.bf16.msra.mxu0 %v815
  %948 = vmatprep.subr.bf16.mxu0 0
  %949 = vmatpush2.bf16.msra.mxu0 0
  %950 = vmatprep.subr.bf16.mxu0 0
  %951 = vmatpush2.bf16.msra.mxu0 0
  %952 = vmatprep.subr.bf16.mxu0 0
  %953 = vmatpush2.bf16.msra.mxu0 0
  %954 = vmatprep.subr.bf16.mxu0 %v924
  %955 = vmatpush2.bf16.msra.mxu0 %v921
  %956 = vmatprep.subr.bf16.mxu0 %v860
  %957 = vmatpush2.bf16.msra.mxu0 %v859
  %958 = vmatprep.subr.bf16.mxu0 %v856
  %959 = vmatpush2.bf16.msra.mxu0 %v855
  %960 = vmatprep.subr.bf16.mxu0 %v852
  %961 = vmatpush2.bf16.msra.mxu0 %v851
  %962 = vmatprep.subr.bf16.mxu0 %v848
  %963 = vmatpush2.bf16.msra.mxu0 %v847
  %964 = vmatprep.mubr.bf16.mxu0 %v917
  %965 = vmatmul.mubr.bf16.gmra.mxu0 %v609
  %v966 = vpop.f32.mrf.mxu0
  %v967 = vadd.f32 0.0, %v966
  %v968 = vpop.f32.mrf.mxu0
  %v969 = vadd.f32 0.0, %v968
  %v970 = vpop.f32.mrf.mxu0
  %v971 = vadd.f32 0.0, %v970
  %v972 = vpop.f32.mrf.mxu0
  %v973 = vadd.f32 0.0, %v972
  %974 = vdwg.mxu0
  %975 = vmatprep.subr.bf16.mxu0 %v846
  %976 = vmatpush1.bf16.msra.mxu0 %v845
  %977 = vmatprep.subr.bf16.mxu0 %v842
  %978 = vmatpush1.bf16.msra.mxu0 %v841
  %979 = vmatprep.subr.bf16.mxu0 %v838
  %980 = vmatpush1.bf16.msra.mxu0 %v837
  %981 = vmatprep.subr.bf16.mxu0 %v834
  %982 = vmatpush1.bf16.msra.mxu0 %v833
  %983 = vmatprep.subr.bf16.mxu0 %v830
  %984 = vmatpush1.bf16.msra.mxu0 %v829
  %985 = vmatprep.subr.bf16.mxu0 %v826
  %986 = vmatpush1.bf16.msra.mxu0 %v825
  %987 = vmatprep.subr.bf16.mxu0 %v822
  %988 = vmatpush1.bf16.msra.mxu0 %v821
  %989 = vmatprep.subr.bf16.mxu0 %v818
  %990 = vmatpush1.bf16.msra.mxu0 %v817
  %991 = vmatprep.subr.bf16.mxu0 0
  %992 = vmatpush2.bf16.msra.mxu0 0
  %993 = vmatprep.subr.bf16.mxu0 0
  %994 = vmatpush2.bf16.msra.mxu0 0
  %995 = vmatprep.subr.bf16.mxu0 0
  %996 = vmatpush2.bf16.msra.mxu0 0
  %997 = vmatprep.subr.bf16.mxu0 %v930
  %998 = vmatpush2.bf16.msra.mxu0 %v927
  %999 = vmatprep.subr.bf16.mxu0 %v862
  %1000 = vmatpush2.bf16.msra.mxu0 %v861
  %1001 = vmatprep.subr.bf16.mxu0 %v858
  %1002 = vmatpush2.bf16.msra.mxu0 %v857
  %1003 = vmatprep.subr.bf16.mxu0 %v854
  %1004 = vmatpush2.bf16.msra.mxu0 %v853
  %1005 = vmatprep.subr.bf16.mxu0 %v850
  %1006 = vmatpush2.bf16.msra.mxu0 %v849
  %1007 = vmatprep.mubr.bf16.mxu0 %v917
  %1008 = vmatmul.mubr.bf16.gmra.mxu0 %v609
  %v1009 = vpop.f32.mrf.mxu0
  %v1010 = vadd.f32 0.0, %v1009
  %v1011 = vpop.f32.mrf.mxu0
  %v1012 = vadd.f32 0.0, %v1011
  %v1013 = vpop.f32.mrf.mxu0
  %v1014 = vadd.f32 0.0, %v1013
  %v1015 = vpop.f32.mrf.mxu0
  %v1016 = vadd.f32 0.0, %v1015
  %1017 = vdwg.mxu0
  %v1018 = vld [vmem:[%s4] sm:$0xff]
  %v1019 = vld [vmem:[%s4 + $0x8] sm:$0xff]
  %v1020 = vld [vmem:[%s4 + $0x10] sm:$0xff]
  %v1021 = vld [vmem:[%s4 + $0x18] sm:$0xff]
  %v1022 = vld [vmem:[%s4 + $0x20] sm:$0xff]
  %v1023 = vld [vmem:[%s4 + $0x28] sm:$0xff]
  %v1024 = vld [vmem:[%s4 + $0x30] sm:$0xff]
  %v1025 = vld [vmem:[%s4 + $0x38] sm:$0xff]
  %v1026 = vmul.f32 %v967, %v1018
  %v1027 = vmul.f32 %v969, %v1019
  %v1028 = vmul.f32 %v1010, %v1020
  %v1029 = vmul.f32 %v1012, %v1021
  %v1030 = vmul.f32 %v971, %v1022
  %v1031 = vmul.f32 %v973, %v1023
  %v1032 = vmul.f32 %v1014, %v1024
  %v1033 = vmul.f32 %v1016, %v1025
  %v1034 = vrot.slane %v1026, 4
  %v1035 = vadd.f32 %v1026, %v1034
  %v1036 = vrot.slane %v1035, 2
  %v1037 = vadd.f32 %v1035, %v1036
  %v1038 = vrot.slane %v1037, 1
  %v1039 = vadd.f32 %v1037, %v1038
  %v1040 = vrot.slane %v1027, 4
  %v1041 = vadd.f32 %v1027, %v1040
  %v1042 = vrot.slane %v1041, 2
  %v1043 = vadd.f32 %v1041, %v1042
  %v1044 = vrot.slane %v1043, 1
  %v1045 = vadd.f32 %v1043, %v1044
  %v1046 = vrot.slane %v1028, 4
  %v1047 = vadd.f32 %v1028, %v1046
  %v1048 = vrot.slane %v1047, 2
  %v1049 = vadd.f32 %v1047, %v1048
  %v1050 = vrot.slane %v1049, 1
  %v1051 = vadd.f32 %v1049, %v1050
  %v1052 = vrot.slane %v1029, 4
  %v1053 = vadd.f32 %v1029, %v1052
  %v1054 = vrot.slane %v1053, 2
  %v1055 = vadd.f32 %v1053, %v1054
  %v1056 = vrot.slane %v1055, 1
  %v1057 = vadd.f32 %v1055, %v1056
  %v1058 = vrot.slane %v1030, 4
  %v1059 = vadd.f32 %v1030, %v1058
  %v1060 = vrot.slane %v1059, 2
  %v1061 = vadd.f32 %v1059, %v1060
  %v1062 = vrot.slane %v1061, 1
  %v1063 = vadd.f32 %v1061, %v1062
  %v1064 = vrot.slane %v1031, 4
  %v1065 = vadd.f32 %v1031, %v1064
  %v1066 = vrot.slane %v1065, 2
  %v1067 = vadd.f32 %v1065, %v1066
  %v1068 = vrot.slane %v1067, 1
  %v1069 = vadd.f32 %v1067, %v1068
  %v1070 = vrot.slane %v1032, 4
  %v1071 = vadd.f32 %v1032, %v1070
  %v1072 = vrot.slane %v1071, 2
  %v1073 = vadd.f32 %v1071, %v1072
  %v1074 = vrot.slane %v1073, 1
  %v1075 = vadd.f32 %v1073, %v1074
  %v1076 = vrot.slane %v1033, 4
  %v1077 = vadd.f32 %v1033, %v1076
  %v1078 = vrot.slane %v1077, 2
  %v1079 = vadd.f32 %v1077, %v1078
  %v1080 = vrot.slane %v1079, 1
  %v1081 = vadd.f32 %v1079, %v1080
  %vm1082 = vcmask 1040384
  %v1083 = vsel %vm1082, %v1039, %v1063
  %v1084 = vsel %vm1082, %v1045, %v1069
  %v1085 = vsel %vm1082, %v1051, %v1075
  %v1086 = vsel %vm1082, %v1057, %v1081
  %1088 = vrot.lane.b32.xlu0 %v1083, 64
  %v1089 = vpop.permute.xlu0 %1088
  %v1091 = vadd.f32 %v1083, %v1089
  %v1092 = vadd.f32 %v1091, %v1084
  %1094 = vrot.lane.b32.xlu0 %v1084, 64
  %v1095 = vpop.permute.xlu0 %1094
  %v1097 = vadd.f32 %v1092, %v1095
  %v1098 = vadd.f32 %v1097, %v1085
  %1100 = vrot.lane.b32.xlu0 %v1085, 64
  %v1101 = vpop.permute.xlu0 %1100
  %v1103 = vadd.f32 %v1098, %v1101
  %v1104 = vadd.f32 %v1103, %v1086
  %1106 = vrot.lane.b32.xlu0 %v1086, 64
  %v1107 = vpop.permute.xlu0 %1106
  %v1109 = vadd.f32 %v1104, %v1107
  %v1110 = vld [vmem:[%s5] sm:$0x1]
  %v1112 = vlaneseq
  %v1113 = vshrl.u32 %v1112, 7
  %v1114 = vsub.s32 0, %v1113
  %v1115 = vrot.slane %v1110, %v1114
  %v1117 = vadd.f32 %v1109, %v1115
  %v1118 = vmax.f32 %v1117, 0.0
  %v1119 = vld [vmem:[%s6] sm:$0x1]
  %v1121 = vlaneseq
  %v1122 = vshrl.u32 %v1121, 7
  %v1123 = vsub.s32 0, %v1122
  %v1124 = vrot.slane %v1119, %v1123
  %v1126 = vmul.f32 %v1118, %v1124
  %vm1127 = vcmask 517120
  %v1128 = vsel %vm1127, %v1126, 0.0
  %1129 = vadd.xlane.f32.xlu0 %v1128
  %v1130 = vpop.xlane.xlu0 %1129
  %v1131 = vld [vmem:[#allocation4] sm:$0x1]
  %v1133 = vlaneseq
  %v1134 = vshrl.u32 %v1133, 7
  %v1135 = vsub.s32 0, %v1134
  %v1136 = vrot.slane %v1131, %v1135
  %v1138 = vadd.f32 %v1130, %v1136
  %v1139 = vand.u32 2147483647, %v1138
  %v1140 = vsub.f32 0.0, %v1139
  %v1141 = vmul.f32 %v1140, 1.442695
  %v1142 = vpow.pop %v1141
  %vm1143 = vcmp.ge.f32.partialorder %v1138, 0.0
  %v1144 = vadd.f32 %v1142, 1.0
  %v1145 = vrcp.pop %v1144
  %v1146 = vmul.f32 1.0, %v1145
  %v1147 = vmul.f32 %v1142, %v1145
  %v1148 = vsel %vm1143, %v1146, %v1147
  %vm1149 = vcmask 1024
  %1150 = vst.msk [vmem:[%s9] sm:$0x3] %vm1149, %v1148
  // Predicated region
  $region68: #{wake_word_forward.1} parent=0 // pred_check
    _
  $region69: #{wake_word_forward.1} parent=0 // pred_check_branch
    %1152 = sbr.rel (0) target = $region71
  $region70: #{wake_word_forward.1} parent=0 // pred_region
    _
  $region71: #{wake_word_forward.1} parent=0 // pred_fallthru
    _
  // Predicated region
  $region72: #{wake_word_forward.1} parent=0 // pred_check
    _
  $region73: #{wake_word_forward.1} parent=0 // pred_check_branch
    %1154 = sbr.rel (0) target = $region75
  $region74: #{wake_word_forward.1} parent=0 // pred_region
    _
  $region75: #{wake_word_forward.1} parent=0 // pred_fallthru
    _
  %1155 = vsyncmov [#allocation3]
  %s1156 = vpop.sfrf %1155
  %p1157 = scmp.eq.s32.totalorder %s1156, 0
  %p1158 = pneg %p1157
  %1160 = shalt.err (%p1158)

</llo_original>
